<compile_context>
chip_gen: v7x
topology: tpu7x:2x2x1
jax: 0.10.0
libtpu: 0.0.40
codegen_flags: <defaults>
</compile_context>

<pallas_src>
import jax
import jax.numpy as jnp
from jax import lax
from jax.experimental import pallas as pl
from jax.experimental.pallas import tpu as pltpu

TEMPERATURE = 0.05


def _supcon_kernel(emb_q_ref, emb_k_ref, lab_col_ref, lab_row_ref, out_ref, kn_ref):
    i = pl.program_id(0)
    tq = emb_q_ref.shape[0]
    B = emb_k_ref.shape[0]
    inv_t = jnp.float32(1.0 / TEMPERATURE)
    inv_b = jnp.float32(1.0 / B)

    @pl.when(i == 0)
    def _init():
        out_ref[0, 0] = jnp.float32(0.0)
        # F.normalize(p=2, eps=1e-12): x * rsqrt(max(||x||^2, 1e-24))  (rsqrt -> EUP)
        k = emb_k_ref[...]
        k_scale = lax.rsqrt(jnp.maximum(jnp.sum(k * k, axis=1, keepdims=True),
                                        jnp.float32(1e-24)))
        kn_ref[...] = k * k_scale

    q = emb_q_ref[...]
    q_scale = lax.rsqrt(jnp.maximum(jnp.sum(q * q, axis=1, keepdims=True),
                                    jnp.float32(1e-24))) * inv_t
    qn = q * q_scale                                   # rows scaled by 1/(||q|| * T)

    # logits = sim/T - 1/T  (constant shift == the reference's per-row max)
    logits = lax.dot_general(
        qn, kn_ref[...],
        dimension_numbers=(((1,), (1,)), ((), ())),
        preferred_element_type=jnp.float32,
    ) - inv_t                                          # (tq, B)

    # diagonal exclusion: global row index of this tile vs key column index
    row_g = lax.broadcasted_iota(jnp.int32, (tq, B), 0) + i * tq
    col_g = lax.broadcasted_iota(jnp.int32, (tq, B), 1)
    not_diag = (row_g != col_g).astype(jnp.float32)

    labels_eq = (lab_col_ref[...] == lab_row_ref[...]).astype(jnp.float32)
    mask = labels_eq * not_diag                        # positives, self excluded

    exp_logits = jnp.exp(logits) * not_diag
    denom = jnp.log(jnp.sum(exp_logits, axis=1, keepdims=True))    # (tq, 1)

    mask_sum = jnp.sum(mask, axis=1, keepdims=True)                # (tq, 1)
    pos_sum = jnp.sum(mask * logits, axis=1, keepdims=True)        # (tq, 1)
    safe = jnp.where(mask_sum == 0.0, jnp.float32(1.0), mask_sum)
    # sum(mask * log_prob) == pos_sum - mask_sum * denom  (log_prob never built)
    per_row = -(pos_sum - mask_sum * denom) / safe                 # (tq, 1)

    out_ref[0, 0] += jnp.sum(per_row) * inv_b


def supcon_loss_plms(batch_emb, labels, temperature=TEMPERATURE):
    """batch_emb: (B, D) float, labels: (B,) int -> scalar float32 loss."""
    assert temperature == TEMPERATURE, "kernel is specialized on TEMPERATURE"
    B, D = batch_emb.shape

    emb = batch_emb.astype(jnp.float32)
    # Pad feature dim to a lane multiple (exact: zero columns change neither norms
    # nor dot products) so the (tq, D) operands fill vregs / MXU contraction lanes.
    d_pad = (-D) % 128
    if d_pad:
        emb = jnp.pad(emb, ((0, 0), (0, d_pad)))
    Dp = D + d_pad

    # Row-tile size: full batch for small B, else a 128/256-row tile that divides B.
    tq = B
    for cand in (256, 128):
        if B > cand and B % cand == 0:
            tq = cand
            break
    # TODO(synk): support B not divisible by the row tile via a row-validity mask.

    labels_i32 = labels.reshape(-1).astype(jnp.int32)
    lab_col = labels_i32.reshape(B, 1)
    lab_row = labels_i32.reshape(1, B)

    out = pl.pallas_call(
        _supcon_kernel,
        out_shape=jax.ShapeDtypeStruct((1, 1), jnp.float32),
        grid=(B // tq,),
        in_specs=[
            pl.BlockSpec((tq, Dp), lambda i: (i, 0)),   # query row tile
            pl.BlockSpec((B, Dp), lambda i: (0, 0)),    # full keys (resident)
            pl.BlockSpec((tq, 1), lambda i: (i, 0)),    # labels column tile
            pl.BlockSpec((1, B), lambda i: (0, 0)),     # labels row (resident)
        ],
        out_specs=pl.BlockSpec(memory_space=pltpu.MemorySpace.SMEM),
        scratch_shapes=[pltpu.VMEM((B, Dp), jnp.float32)],  # normalized keys
        compiler_params=pltpu.CompilerParams(
            dimension_semantics=("arbitrary",),  # scalar output accumulates across tiles
            vmem_limit_bytes=64 * 1024 * 1024,
        ),
    )(emb, emb, lab_col, lab_row)
    # TODO(synk): add a custom_vjp (pure-JAX backward) if this loss is trained through.
    return out[0, 0]


def _reference(batch_emb, labels, temperature=TEMPERATURE):
    # pure-JAX reference mirroring the PyTorch forward exactly
    labels = labels.reshape(-1, 1)
    B = batch_emb.shape[0]
    mask = (labels == labels.T).astype(jnp.float32)
    norm = jnp.maximum(jnp.linalg.norm(batch_emb, axis=1, keepdims=True), 1e-12)
    nemb = batch_emb / norm
    dot = (nemb @ nemb.T) / temperature
    logits = dot - jnp.max(dot, axis=1, keepdims=True)
    logits_mask = 1.0 - jnp.eye(B, dtype=jnp.float32)
    mask = mask * logits_mask
    exp_logits = jnp.exp(logits) * logits_mask
    log_prob = logits - jnp.log(exp_logits.sum(1, keepdims=True))
    mask_sum = mask.sum(1)
    mask_sum = jnp.where(mask_sum == 0, jnp.ones_like(mask_sum), mask_sum)
    mean_log_prob_pos = -(mask * log_prob).sum(1) / mask_sum
    return mean_log_prob_pos.mean()


if __name__ == "__main__":
    key = jax.random.PRNGKey(0)
    k_emb, k_lab = jax.random.split(key)

    B, D = 8, 32
    batch_emb = jax.random.normal(k_emb, (B, D), dtype=jnp.float32)
    labels = jax.random.randint(k_lab, (B,), 0, 3, dtype=jnp.int32)

    loss = supcon_loss_plms(batch_emb, labels)
    loss = jax.block_until_ready(loss)

    ref = _reference(batch_emb, labels)
    assert jnp.allclose(loss, ref, atol=5e-5, rtol=1e-4), (loss, ref)

    print("KERNEL_OK")
</pallas_src>

<mosaic_0001>
module attributes {stable_mosaic.version = 11 : i64} {
  func.func @_supcon_kernel(%arg0: i32, %arg1: memref<8x128xf32, #tpu.memory_space<vmem>>, %arg2: memref<8x128xf32, #tpu.memory_space<vmem>>, %arg3: memref<8x1xi32, #tpu.memory_space<vmem>>, %arg4: memref<1x8xi32, #tpu.memory_space<vmem>>, %arg5: memref<1x1xf32, #tpu.memory_space<smem>>, %arg6: memref<8x128xf32, #tpu.memory_space<vmem>>) attributes {dimension_semantics = [#tpu.dimension_semantics<arbitrary>], iteration_bounds = array<i64: 1>, scalar_prefetch = 0 : i64, scratch_operands = 1 : i64, tpu.core_type = #tpu.core_type<tc>, window_params = [{transform_indices = @transform_0, window_bounds = array<i64: 8, 128>}, {pipeline_mode = #tpu.pipeline_mode<synchronous>, transform_indices = @transform_1, window_bounds = array<i64: 8, 128>}, {transform_indices = @transform_2, window_bounds = array<i64: 8, 1>}, {pipeline_mode = #tpu.pipeline_mode<synchronous>, transform_indices = @transform_3, window_bounds = array<i64: 1, 8>}, {transform_indices = @transform_4, window_bounds = array<i64: 1, 1>}]} {
    %c0_i32 = arith.constant 0 : i32
    %0 = arith.cmpi eq, %arg0, %c0_i32 : i32
    %1 = arith.extui %0 : i1 to i32
    %c0_i32_0 = arith.constant 0 : i32
    %2 = arith.cmpi ne, %1, %c0_i32_0 : i32
    scf.if %2 {
      %cst_24 = arith.constant 0.000000e+00 : f32
      %c0_25 = arith.constant 0 : index
      %c0_26 = arith.constant 0 : index
      %61 = memref.load %arg5[%c0_25, %c0_26] : memref<1x1xf32, #tpu.memory_space<smem>>
      memref.store %cst_24, %arg5[%c0_25, %c0_26] : memref<1x1xf32, #tpu.memory_space<smem>>
      %c0_27 = arith.constant 0 : index
      %c0_28 = arith.constant 0 : index
      %62 = vector.load %arg2[%c0_27, %c0_28] : memref<8x128xf32, #tpu.memory_space<vmem>>, vector<8x128xf32>
      %63 = arith.mulf %62, %62 : vector<8x128xf32>
      %cst_29 = arith.constant dense<0.000000e+00> : vector<8xf32>
      %64 = vector.multi_reduction <add>, %63, %cst_29 [1] : vector<8x128xf32> to vector<8xf32>
      %65 = vector.shape_cast %64 : vector<8xf32> to vector<8x1xf32>
      %cst_30 = arith.constant 1.000000e-24 : f32
      %66 = vector.broadcast %cst_30 : f32 to vector<8x1xf32>
      %67 = arith.maximumf %65, %66 : vector<8x1xf32>
      %68 = math.rsqrt %67 : vector<8x1xf32>
      %69 = vector.broadcast %68 : vector<8x1xf32> to vector<8x128xf32>
      %70 = arith.mulf %62, %69 : vector<8x128xf32>
      %c0_31 = arith.constant 0 : index
      %c0_32 = arith.constant 0 : index
      %71 = vector.load %arg6[%c0_31, %c0_32] : memref<8x128xf32, #tpu.memory_space<vmem>>, vector<8x128xf32>
      tpu.vector_store %arg6[%c0_31, %c0_32], %70 {strides = array<i32>} : memref<8x128xf32, #tpu.memory_space<vmem>>, vector<8x128xf32>,
    } else {
    }
    %c0 = arith.constant 0 : index
    %c0_1 = arith.constant 0 : index
    %3 = vector.load %arg1[%c0, %c0_1] : memref<8x128xf32, #tpu.memory_space<vmem>>, vector<8x128xf32>
    %4 = arith.mulf %3, %3 : vector<8x128xf32>
    %cst = arith.constant dense<0.000000e+00> : vector<8xf32>
    %5 = vector.multi_reduction <add>, %4, %cst [1] : vector<8x128xf32> to vector<8xf32>
    %6 = vector.shape_cast %5 : vector<8xf32> to vector<8x1xf32>
    %cst_2 = arith.constant 1.000000e-24 : f32
    %7 = vector.broadcast %cst_2 : f32 to vector<8x1xf32>
    %8 = arith.maximumf %6, %7 : vector<8x1xf32>
    %9 = math.rsqrt %8 : vector<8x1xf32>
    %cst_3 = arith.constant 2.000000e+01 : f32
    %10 = vector.broadcast %cst_3 : f32 to vector<8x1xf32>
    %11 = arith.mulf %9, %10 : vector<8x1xf32>
    %12 = vector.broadcast %11 : vector<8x1xf32> to vector<8x128xf32>
    %13 = arith.mulf %3, %12 : vector<8x128xf32>
    %c0_4 = arith.constant 0 : index
    %c0_5 = arith.constant 0 : index
    %14 = vector.load %arg6[%c0_4, %c0_5] : memref<8x128xf32, #tpu.memory_space<vmem>>, vector<8x128xf32>
    %cst_6 = arith.constant dense<0.000000e+00> : vector<8x8xf32>
    %15 = tpu.matmul %13, %14, %cst_6 {dimension_numbers = #tpu.dot_dimension_numbers<[1], [1], [0], [0], [0, 0, 1, 0], [], []>} : vector<8x128xf32>, vector<8x128xf32>, vector<8x8xf32> -> vector<8x8xf32>
    %cst_7 = arith.constant 2.000000e+01 : f32
    %16 = vector.broadcast %cst_7 : f32 to vector<8x8xf32>
    %17 = arith.subf %15, %16 : vector<8x8xf32>
    %18 = tpu.iota {dimensions = array<i32: 0>} : vector<8x8xi32>
    %c8_i32 = arith.constant 8 : i32
    %19 = arith.muli %arg0, %c8_i32 : i32
    %20 = vector.broadcast %19 : i32 to vector<8x8xi32>
    %21 = arith.addi %18, %20 : vector<8x8xi32>
    %22 = tpu.iota {dimensions = array<i32: 1>} : vector<8x8xi32>
    %23 = arith.cmpi ne, %21, %22 : vector<8x8xi32>
    %24 = arith.extui %23 : vector<8x8xi1> to vector<8x8xi32>
    %25 = arith.sitofp %24 : vector<8x8xi32> to vector<8x8xf32>
    %c0_8 = arith.constant 0 : index
    %c0_9 = arith.constant 0 : index
    %26 = vector.load %arg3[%c0_8, %c0_9] : memref<8x1xi32, #tpu.memory_space<vmem>>, vector<8x1xi32>
    %c0_10 = arith.constant 0 : index
    %c0_11 = arith.constant 0 : index
    %27 = vector.load %arg4[%c0_10, %c0_11] : memref<1x8xi32, #tpu.memory_space<vmem>>, vector<1x8xi32>
    %28 = vector.broadcast %26 : vector<8x1xi32> to vector<8x8xi32>
    %29 = vector.broadcast %27 : vector<1x8xi32> to vector<8x8xi32>
    %30 = arith.cmpi eq, %28, %29 : vector<8x8xi32>
    %31 = arith.extui %30 : vector<8x8xi1> to vector<8x8xi32>
    %32 = arith.sitofp %31 : vector<8x8xi32> to vector<8x8xf32>
    %33 = arith.mulf %32, %25 : vector<8x8xf32>
    %34 = math.exp %17 : vector<8x8xf32>
    %35 = arith.mulf %34, %25 : vector<8x8xf32>
    %cst_12 = arith.constant dense<0.000000e+00> : vector<8xf32>
    %36 = vector.multi_reduction <add>, %35, %cst_12 [1] : vector<8x8xf32> to vector<8xf32>
    %37 = vector.shape_cast %36 : vector<8xf32> to vector<8x1xf32>
    %38 = math.log %37 : vector<8x1xf32>
    %cst_13 = arith.constant dense<0.000000e+00> : vector<8xf32>
    %39 = vector.multi_reduction <add>, %33, %cst_13 [1] : vector<8x8xf32> to vector<8xf32>
    %40 = vector.shape_cast %39 : vector<8xf32> to vector<8x1xf32>
    %41 = arith.mulf %33, %17 : vector<8x8xf32>
    %cst_14 = arith.constant dense<0.000000e+00> : vector<8xf32>
    %42 = vector.multi_reduction <add>, %41, %cst_14 [1] : vector<8x8xf32> to vector<8xf32>
    %43 = vector.shape_cast %42 : vector<8xf32> to vector<8x1xf32>
    %cst_15 = arith.constant 0.000000e+00 : f32
    %44 = vector.broadcast %cst_15 : f32 to vector<8x1xf32>
    %45 = arith.cmpf oeq, %40, %44 : vector<8x1xf32>
    %cst_16 = arith.constant 1.000000e+00 : f32
    %46 = vector.broadcast %cst_16 : f32 to vector<8x1xf32>
    %47 = arith.select %45, %46, %40 : vector<8x1xi1>, vector<8x1xf32>
    %48 = arith.mulf %40, %38 : vector<8x1xf32>
    %49 = arith.subf %43, %48 : vector<8x1xf32>
    %cst_17 = arith.constant 0.000000e+00 : f32
    %50 = vector.broadcast %cst_17 : f32 to vector<8x1xf32>
    %51 = arith.subf %50, %49 : vector<8x1xf32>
    %52 = arith.divf %51, %47 : vector<8x1xf32>
    %c0_18 = arith.constant 0 : index
    %c0_19 = arith.constant 0 : index
    %53 = memref.load %arg5[%c0_18, %c0_19] : memref<1x1xf32, #tpu.memory_space<smem>>
    %54 = vector.shape_cast %52 : vector<8x1xf32> to vector<1x8x1xf32>
    %cst_20 = arith.constant dense<0.000000e+00> : vector<1xf32>
    %55 = vector.multi_reduction <add>, %54, %cst_20 [1, 2] : vector<1x8x1xf32> to vector<1xf32>
    %56 = vector.shape_cast %55 : vector<1xf32> to vector<1x1x1xf32>
    %57 = vector.extract %56[0, 0, 0] : f32 from vector<1x1x1xf32>
    %cst_21 = arith.constant 1.250000e-01 : f32
    %58 = arith.mulf %57, %cst_21 : f32
    %59 = arith.addf %53, %58 : f32
    %c0_22 = arith.constant 0 : index
    %c0_23 = arith.constant 0 : index
    %60 = memref.load %arg5[%c0_22, %c0_23] : memref<1x1xf32, #tpu.memory_space<smem>>
    memref.store %59, %arg5[%c0_22, %c0_23] : memref<1x1xf32, #tpu.memory_space<smem>>
    return
  }
  func.func @transform_0(%arg0: i32) -> (i32, i32) {
    %c0_i32 = arith.constant 0 : i32
    %c0_i32_0 = arith.constant 0 : i32
    return %arg0, %c0_i32 : i32, i32
  }
  func.func @transform_1(%arg0: i32) -> (i32, i32) {
    %c0_i32 = arith.constant 0 : i32
    %c0_i32_0 = arith.constant 0 : i32
    %c0_i32_1 = arith.constant 0 : i32
    return %c0_i32, %c0_i32_0 : i32, i32
  }
  func.func @transform_2(%arg0: i32) -> (i32, i32) {
    %c0_i32 = arith.constant 0 : i32
    %c0_i32_0 = arith.constant 0 : i32
    return %arg0, %c0_i32 : i32, i32
  }
  func.func @transform_3(%arg0: i32) -> (i32, i32) {
    %c0_i32 = arith.constant 0 : i32
    %c0_i32_0 = arith.constant 0 : i32
    %c0_i32_1 = arith.constant 0 : i32
    return %c0_i32, %c0_i32_0 : i32, i32
  }
  func.func @transform_4(%arg0: i32) -> (i32, i32) {
    %c0_i32 = arith.constant 0 : i32
    %c0_i32_0 = arith.constant 0 : i32
    %c0_i32_1 = arith.constant 0 : i32
    return %c0_i32, %c0_i32_0 : i32, i32
  }
}

</mosaic_0001>

<llo_original>
// kernel: tpu_custom_call.1
$region0: #{tpu_custom_call.1}
  #allocation0 [shape = 'u32[]', space=smem, size = 0x4, offset = 0x4, fixed_abs, tag = 'smem constant byte address 0x4 - core index']
  #allocation1 [shape = 'u32[144,128]{1,0:T(1,128)}', space=vmem, size = 0x12000, scoped, tag = 'internal scratch']
  #allocation2 [shape = 'f32[8,128]{1,0:T(8,128)}', space=vmem, size = 0x1000, scoped, tag = 'scratch operand']
  %s0 = inlined_call_operand.hbm [shape: f32[8,128], index: 0, kind: input, shape index: {}]
  %s1 = inlined_call_operand.hbm [shape: f32[8,128], index: 1, kind: input, shape index: {}]
  %s2 = inlined_call_operand.hbm [shape: s32[8,1], index: 2, kind: input, shape index: {}]
  %s3 = inlined_call_operand.hbm [shape: s32[1,8], index: 3, kind: input, shape index: {}]
  %s4 = inlined_call_operand.hbm [shape: f32[1,1], index: 4, kind: output, shape index: {}]
  %s5 = sld [smem:[#allocation0]]
  $region46: #{tpu_custom_call.1} parent=0
    _
  %s7 = ssub.s32 1, %s5
  %s8 = scalar_select 0, %s7, %s5
  $region1: #{tpu_custom_call.1} parent=0
    #allocation3 [shape = 'u8[4096]{0}', space=vmem, size = 0x1000, scoped, tag = 'input window, operand 0, single buffered']
    #allocation4 [shape = 's32[1]{0}', space=sflag, size = 0x4, scoped, tag = 'scoped memory for tpu_custom_call.1']
    #allocation5 [shape = 's32[1]{0}', space=sflag, size = 0x4, scoped, tag = 'scoped memory for tpu_custom_call.1']
    #allocation6 [shape = 'u8[4096]{0}', space=vmem, size = 0x1000, scoped, tag = 'input window, operand 1, single buffered']
    #allocation7 [shape = 's32[1]{0}', space=sflag, size = 0x4, scoped, tag = 'scoped memory for tpu_custom_call.1']
    #allocation8 [shape = 'u8[4096]{0}', space=vmem, size = 0x1000, scoped, tag = 'input window, operand 2, single buffered']
    #allocation9 [shape = 'u8[512]{0}', space=vmem, size = 0x400, scoped, tag = 'input window, operand 3, single buffered']
    #allocation10 [shape = 's32[1]{0}', space=sflag, size = 0x4, scoped, tag = 'scoped memory for tpu_custom_call.1']
    #allocation11 [shape = 'u8[512]{0}', space=smem, size = 0x200, scoped, tag = 'output window, operand 0, single buffered']
    %9 = vsyncpa [#allocation4], 0
    %10 = vsyncpa [#allocation7], 0
    %11 = vsyncpa [#allocation10], 0
    %12 = vsyncpa [#allocation5], 0
    // Predicated region
    $region2: #{tpu_custom_call.1} parent=1 // pred_check
      _
    $region3: #{tpu_custom_call.1} parent=1 // pred_check_branch
      %14 = sbr.rel (0) target = $region5
    $region4: #{tpu_custom_call.1} parent=1 // pred_region
      %s16 = ssub.s32 128, 128
      %17 = vsyncadd [#allocation4], %s16
      %s19 = sshll.u32 [#allocation3], 4
      %s20 = int_to_ptr.vmem [resolvable:$true] %s19
      %22 = dma.hbm_to_vmem [thread:$0]  %s0, 128, %s20, [#allocation4]
    $region5: #{tpu_custom_call.1} parent=1 // pred_fallthru
      _
    // Predicated region
    $region6: #{tpu_custom_call.1} parent=1 // pred_check
      _
    $region7: #{tpu_custom_call.1} parent=1 // pred_check_branch
      %24 = sbr.rel (0) target = $region9
    $region8: #{tpu_custom_call.1} parent=1 // pred_region
      %s26 = ssub.s32 128, 128
      %27 = vsyncadd [#allocation7], %s26
      %s29 = sshll.u32 [#allocation6], 4
      %s30 = int_to_ptr.vmem [resolvable:$true] %s29
      %32 = dma.hbm_to_vmem [thread:$0]  %s1, 128, %s30, [#allocation7]
    $region9: #{tpu_custom_call.1} parent=1 // pred_fallthru
      _
    // Predicated region
    $region10: #{tpu_custom_call.1} parent=1 // pred_check
      _
    $region11: #{tpu_custom_call.1} parent=1 // pred_check_branch
      %34 = sbr.rel (0) target = $region13
    $region12: #{tpu_custom_call.1} parent=1 // pred_region
      %s36 = ssub.s32 128, 128
      %37 = vsyncadd [#allocation7], %s36
      %s39 = sshll.u32 [#allocation8], 4
      %s40 = int_to_ptr.vmem [resolvable:$true] %s39
      %42 = dma.hbm_to_vmem [thread:$0]  %s2, 128, %s40, [#allocation7]
    $region13: #{tpu_custom_call.1} parent=1 // pred_fallthru
      _
    // Predicated region
    $region14: #{tpu_custom_call.1} parent=1 // pred_check
      _
    $region15: #{tpu_custom_call.1} parent=1 // pred_check_branch
      %44 = sbr.rel (0) target = $region17
    $region16: #{tpu_custom_call.1} parent=1 // pred_region
      %s46 = ssub.s32 16, 16
      %47 = vsyncadd [#allocation10], %s46
      %s49 = sshll.u32 [#allocation9], 4
      %s50 = int_to_ptr.vmem [resolvable:$true] %s49
      %52 = dma.hbm_to_vmem [thread:$0]  %s3, 16, %s50, [#allocation10]
    $region17: #{tpu_custom_call.1} parent=1 // pred_fallthru
      _
    // Predicated region
    $region18: #{tpu_custom_call.1} parent=1 // pred_check
      _
    $region19: #{tpu_custom_call.1} parent=1 // pred_check_branch
      %54 = sbr.rel (0) target = $region21
    $region20: #{tpu_custom_call.1} parent=1 // pred_region
      %55 = dma.done [#allocation4], 128
    $region21: #{tpu_custom_call.1} parent=1 // pred_fallthru
      _
    // Predicated region
    $region22: #{tpu_custom_call.1} parent=1 // pred_check
      _
    $region23: #{tpu_custom_call.1} parent=1 // pred_check_branch
      %57 = sbr.rel (0) target = $region25
    $region24: #{tpu_custom_call.1} parent=1 // pred_region
      %58 = dma.done [#allocation7], 128
    $region25: #{tpu_custom_call.1} parent=1 // pred_fallthru
      _
    // Predicated region
    $region26: #{tpu_custom_call.1} parent=1 // pred_check
      _
    $region27: #{tpu_custom_call.1} parent=1 // pred_check_branch
      %60 = sbr.rel (0) target = $region29
    $region28: #{tpu_custom_call.1} parent=1 // pred_region
      %61 = dma.done [#allocation7], 128
    $region29: #{tpu_custom_call.1} parent=1 // pred_fallthru
      _
    // Predicated region
    $region30: #{tpu_custom_call.1} parent=1 // pred_check
      _
    $region31: #{tpu_custom_call.1} parent=1 // pred_check_branch
      %63 = sbr.rel (0) target = $region33
    $region32: #{tpu_custom_call.1} parent=1 // pred_region
      %64 = dma.done [#allocation10], 16
    $region33: #{tpu_custom_call.1} parent=1 // pred_fallthru
      _
    %p65 = scmp.eq.s32.totalorder 0, 0
    // Predicated region
    $region34: #{tpu_custom_call.1} parent=1 // pred_check
      %p66 = pneg %p65
    $region35: #{tpu_custom_call.1} parent=1 // pred_check_branch
      %68 = sbr.rel (%p66) target = $region37
    $region36: #{tpu_custom_call.1} parent=1 // pred_region
      %s69 = scalar_lea.smem [#allocation11], 0
      %70 = sst [smem:[%s69]] 0.0
      %v71 = vld [vmem:[#allocation6] sm:$0xff]
      %v72 = vmul.f32 %v71, %v71
      %73 = vadd.xlane.f32.xlu0 %v72
      %v74 = vpop.xlane.xlu0 %73
      %v75 = vmax.f32 %v74, 1e-24
      %v76 = vrsqrt.pop %v75
      %v77 = vmul.f32 %v71, %v76
      %78 = vst [vmem:[#allocation2] sm:$0xff] %v77
    $region37: #{tpu_custom_call.1} parent=1 // pred_fallthru
      _
    %v79 = vld [vmem:[#allocation3] sm:$0xff]
    %v80 = vmul.f32 %v79, %v79
    %81 = vadd.xlane.f32.xlu0 %v80
    %v82 = vpop.xlane.xlu0 %81
    %v83 = vmax.f32 %v82, 1e-24
    %v84 = vrsqrt.pop %v83
    %v85 = vmul.f32 %v84, 20.0
    %v86 = vmul.f32 %v79, %v85
    %v87 = vld [vmem:[#allocation2] sm:$0xff]
    %88 = vmatprep.subr.mxu0 0.0
    %89 = vmatpush1.xpose.msra.mxu0 %v87
    %90 = vmatprep.subr.mxu0 0.0
    %91 = vmatpush1.xpose.msra.mxu0 0.0
    %92 = vmatprep.subr.mxu0 0.0
    %93 = vmatpush1.xpose.msra.mxu0 0.0
    %94 = vmatprep.subr.mxu0 0.0
    %95 = vmatpush1.xpose.msra.mxu0 0.0
    %96 = vmatprep.subr.mxu0 0.0
    %97 = vmatpush1.xpose.msra.mxu0 0.0
    %98 = vmatprep.subr.mxu0 0.0
    %99 = vmatpush1.xpose.msra.mxu0 0.0
    %100 = vmatprep.subr.mxu0 0.0
    %101 = vmatpush1.xpose.msra.mxu0 0.0
    %102 = vmatprep.subr.mxu0 0.0
    %103 = vmatpush1.xpose.msra.mxu0 0.0
    %104 = vmatprep.subr.mxu0 0.0
    %105 = vmatpush1.xpose.msra.mxu0 0.0
    %106 = vmatprep.subr.mxu0 0.0
    %107 = vmatpush1.xpose.msra.mxu0 0.0
    %108 = vmatprep.subr.mxu0 0.0
    %109 = vmatpush1.xpose.msra.mxu0 0.0
    %110 = vmatprep.subr.mxu0 0.0
    %111 = vmatpush1.xpose.msra.mxu0 0.0
    %112 = vmatprep.subr.mxu0 0.0
    %113 = vmatpush1.xpose.msra.mxu0 0.0
    %114 = vmatprep.subr.mxu0 0.0
    %115 = vmatpush1.xpose.msra.mxu0 0.0
    %116 = vmatprep.subr.mxu0 0.0
    %117 = vmatpush1.xpose.msra.mxu0 0.0
    %118 = vmatprep.subr.mxu0 0.0
    %119 = vmatpush1.xpose.msra.mxu0 0.0
    %120 = vmatprep.subr.mxu0 0.0
    %121 = vmatpush1.xpose.msra.mxu0 0.0
    %122 = vmatprep.subr.mxu0 0.0
    %123 = vmatpush1.xpose.msra.mxu0 0.0
    %124 = vmatprep.subr.mxu0 0.0
    %125 = vmatpush1.xpose.msra.mxu0 0.0
    %126 = vmatprep.subr.mxu0 0.0
    %127 = vmatpush1.xpose.msra.mxu0 0.0
    %128 = vmatprep.subr.mxu0 0.0
    %129 = vmatpush1.xpose.msra.mxu0 0.0
    %130 = vmatprep.subr.mxu0 0.0
    %131 = vmatpush1.xpose.msra.mxu0 0.0
    %132 = vmatprep.subr.mxu0 0.0
    %133 = vmatpush1.xpose.msra.mxu0 0.0
    %134 = vmatprep.subr.mxu0 0.0
    %135 = vmatpush1.xpose.msra.mxu0 0.0
    %136 = vmatprep.subr.mxu0 0.0
    %137 = vmatpush1.xpose.msra.mxu0 0.0
    %138 = vmatprep.subr.mxu0 0.0
    %139 = vmatpush1.xpose.msra.mxu0 0.0
    %140 = vmatprep.subr.mxu0 0.0
    %141 = vmatpush1.xpose.msra.mxu0 0.0
    %142 = vmatprep.subr.mxu0 0.0
    %143 = vmatpush1.xpose.msra.mxu0 0.0
    %144 = vmatprep.subr.mxu0 0.0
    %145 = vmatpush1.xpose.msra.mxu0 0.0
    %146 = vmatprep.subr.mxu0 0.0
    %147 = vmatpush1.xpose.msra.mxu0 0.0
    %148 = vmatprep.subr.mxu0 0.0
    %149 = vmatpush1.xpose.msra.mxu0 0.0
    %150 = vmatprep.subr.mxu0 0.0
    %151 = vmatpush1.xpose.msra.mxu0 0.0
    %152 = vmatprep.mubr.f32.mxu0 0.0
    %153 = vmatmul.mubr.f32.gmra.mrb[0].mxu0 %v86
    %v154 = vpop.f32.mrb[0].mxu0
    %v155 = vadd.f32 0.0, %v154
    %v156 = vpop.f32.mrb[0].mxu0
    %157 = vdwg.mxu0
    %v158 = vsub.f32 %v155, 20.0
    %v159 = vlaneseq
    %v160 = vshrl.u32 %v159, 7
    %s161 = smul.u32 0, 8
    %v162 = vstv %s161
    %v163 = vadd.s32 %v160, %v162
    %v164 = vlaneseq
    %v165 = vand.u32 %v164, 127
    %vm166 = vcmp.ne.s32.totalorder %v163, %v165
    %v167 = vsel %vm166, 1, 0
    %v168 = vcvt.s32.f32 %v167
    %v169 = vld [vmem:[#allocation8] sm:$0xff]
    %v170 = vld [vmem:[#allocation9] sm:$0x1]
    %171 = vset.pattern.permute.xlu0 0
    %172 = vperm.xlu0 %171, %v169
    %v173 = vpop.permute.xlu0 %172
    %v174 = vlaneseq
    %v175 = vshrl.u32 %v174, 7
    %v176 = vsub.s32 0, %v175
    %v177 = vrot.slane %v170, %v176
    %vm178 = vcmp.eq.s32.totalorder %v173, %v177
    %v179 = vsel %vm178, 1, 0
    %v180 = vcvt.s32.f32 %v179
    %v181 = vmul.f32 %v180, %v168
    %v182 = vmul.f32 %v158, 1.442695
    %v183 = vpow.pop %v182
    %v184 = vmul.f32 %v183, %v168
    %vm185 = vcmask 64512
    %v186 = vsel %vm185, %v184, 0.0
    %187 = vadd.xlane.f32.xlu0 %v186
    %v188 = vpop.xlane.xlu0 %187
    %v189 = vlog2.pop %v188
    %v190 = vmul.f32 %v189, 0.6931472
    %v191 = vsel %vm185, %v181, 0.0
    %192 = vadd.xlane.f32.xlu0 %v191
    %v193 = vpop.xlane.xlu0 %192
    %v194 = vmul.f32 %v181, %v158
    %v195 = vsel %vm185, %v194, 0.0
    %196 = vadd.xlane.f32.xlu0 %v195
    %v197 = vpop.xlane.xlu0 %196
    %vm198 = vcmp.eq.f32.partialorder %v193, 0.0
    %v199 = vsel %vm198, 1.0, %v193
    %v200 = vmul.f32 %v193, %v190
    %v201 = vsub.f32 %v197, %v200
    %v202 = vsub.f32 0.0, %v201
    %v203 = vrcp.pop %v199
    %v204 = vmul.f32 %v202, %v203
    %s205 = sld [smem:[#allocation11]]
    %vm206 = vcmask 7168
    %v207 = vsel %vm206, %v204, 0.0
    %208 = vadd.xlane.f32.xlu0 %v207
    %v209 = vpop.xlane.xlu0 %208
    %v210 = vrot.slane %v209, 4
    %v211 = vadd.f32 %v209, %v210
    %v212 = vrot.slane %v211, 2
    %v213 = vadd.f32 %v211, %v212
    %v214 = vrot.slane %v213, 1
    %v215 = vadd.f32 %v213, %v214
    %s216 = vtos %v215
    %s217 = smul.f32 %s216, 0.125
    %s218 = sadd.f32 %s205, %s217
    %s219 = scalar_lea.smem [#allocation11], 0
    %220 = sst [smem:[%s219]] %s218
    // Predicated region
    $region38: #{tpu_custom_call.1} parent=1 // pred_check
      _
    $region39: #{tpu_custom_call.1} parent=1 // pred_check_branch
      %222 = sbr.rel (0) target = $region41
    $region40: #{tpu_custom_call.1} parent=1 // pred_region
      %s224 = ssub.s32 16, 16
      %225 = vsyncadd [#allocation5], %s224
      %228 = dma.smem_to_hbm [#allocation11], 16, %s4, [#allocation5]
    $region41: #{tpu_custom_call.1} parent=1 // pred_fallthru
      _
    // Predicated region
    $region42: #{tpu_custom_call.1} parent=1 // pred_check
      _
    $region43: #{tpu_custom_call.1} parent=1 // pred_check_branch
      %230 = sbr.rel (0) target = $region45
    $region44: #{tpu_custom_call.1} parent=1 // pred_region
      %231 = dma.done [#allocation5], 16
    $region45: #{tpu_custom_call.1} parent=1 // pred_fallthru
      _
    %232 = sfence
    %233 = vsyncpa [#allocation4], 1
    %234 = vsyncpa [#allocation7], 1
    %235 = vsyncpa [#allocation10], 1
    %236 = vsyncpa [#allocation5], 1

</llo_original>
